<compile_context>
chip_gen: v6e
topology: v6e:2x2x1
jax: 0.10.0
libtpu: 0.0.40
codegen_flags: <defaults>
</compile_context>

<pallas_src>
import jax
import jax.numpy as jnp
from jax.experimental import pallas as pl
from jax.experimental.pallas import tpu as pltpu

D_IN = 28 * 28
H1 = 128
H2 = 256
N_CLS = 10
OUT_PAD = 128                      # lane-dense padded logits width
TB_DEFAULT = 2048                  # batch tile (sweep 1024-4096)
VMEM_LIMIT_BYTES = 48 * 1024 * 1024


def _round_up(x, m):
    return ((x + m - 1) // m) * m


def _mnist_mlp_kernel(x_ref, w1_ref, b1_ref, w2_ref, b2_ref, w3_ref, b3_ref, o_ref):
    # x_ref: (TB, 784) f32 ; w*: bf16 (in, out) ; b*: (1, out) f32 ; o_ref: (TB, 128) bf16
    # Cast the streamed f32 tile to bf16 in-VMEM for the MXU (cheap VPU work on
    # data already on-chip); all accumulation / elementwise math stays f32.
    x = x_ref[...].astype(jnp.bfloat16)

    h1 = jnp.dot(x, w1_ref[...], preferred_element_type=jnp.float32) + b1_ref[...]
    h1 = jnp.maximum(h1, 0.0)                      # relu(fc1)
    # dropout -> identity (eval mode)

    h2 = jnp.dot(h1.astype(jnp.bfloat16), w2_ref[...],
                 preferred_element_type=jnp.float32) + b2_ref[...]
    h2 = jnp.maximum(h2, 0.0)                      # relu(fc2)
    # dropout -> identity (eval mode)

    logits = jnp.dot(h2.astype(jnp.bfloat16), w3_ref[...],
                     preferred_element_type=jnp.float32) + b3_ref[...]

    # log_softmax over the 128 padded lanes; padded lanes carry bias -1e30 so
    # exp(shifted) underflows to 0 and the result equals log_softmax over the
    # real 10 classes.  Padded output columns are sliced off in the wrapper.
    m = jnp.max(logits, axis=-1, keepdims=True)
    shifted = logits - m
    lse = jnp.log(jnp.sum(jnp.exp(shifted), axis=-1, keepdims=True))
    o_ref[...] = (shifted - lse).astype(o_ref.dtype)


def mnist_net_forward(x_nchw, params, tb=TB_DEFAULT):
    """x_nchw: (B, 1, 28, 28) float32 -> (B, 10) log-probabilities (bfloat16)."""
    w1, b1, w2, b2, w3, b3 = params
    B = x_nchw.shape[0]
    # view(-1, 784): layout-preserving reshape, no HBM copy.  Keep f32 — the
    # bf16 cast happens inside the kernel so x is only read once from HBM.
    x = x_nchw.reshape(B, D_IN).astype(jnp.float32)

    # Batch tiling: bound pad waste to <8 rows/tile instead of round_up(B, TB).
    num_tiles = max(1, pl.cdiv(B, tb))
    TB = _round_up(pl.cdiv(B, num_tiles), 8)
    Bp = TB * num_tiles
    if Bp != B:
        x = jnp.pad(x, ((0, Bp - B), (0, 0)))      # small (<8 rows/tile) pad copy
    grid = (num_tiles,)

    # Pad fc3 to 128 output lanes for a lane-dense store; padded biases = -1e30.
    w3p = jnp.pad(w3, ((0, 0), (0, OUT_PAD - N_CLS)))
    b3p = jnp.pad(b3, ((0, 0), (0, OUT_PAD - N_CLS)), constant_values=-1e30)

    # Resident bf16 weights; biases stay f32.
    w1b = w1.astype(jnp.bfloat16)
    w2b = w2.astype(jnp.bfloat16)
    w3b = w3p.astype(jnp.bfloat16)
    b1f = b1.astype(jnp.float32)
    b2f = b2.astype(jnp.float32)
    b3f = b3p.astype(jnp.float32)

    const = lambda shape: pl.BlockSpec(shape, lambda i: (0,) * len(shape))

    flops = 2 * Bp * (D_IN * H1 + H1 * H2 + H2 * OUT_PAD)
    bytes_accessed = (
        Bp * D_IN * 4                                   # x stream (f32, single read)
        + (D_IN * H1 + H1 * H2 + H2 * OUT_PAD) * 2      # weights (bf16, resident)
        + (H1 + H2 + OUT_PAD) * 4                       # biases (f32)
        + Bp * OUT_PAD * 2                              # output (bf16)
    )

    out = pl.pallas_call(
        _mnist_mlp_kernel,
        out_shape=jax.ShapeDtypeStruct((Bp, OUT_PAD), jnp.bfloat16),
        grid=grid,
        in_specs=[
            pl.BlockSpec((TB, D_IN), lambda i: (i, 0)),     # streamed f32 x tile
            const((D_IN, H1)), const((1, H1)),              # fc1 (resident)
            const((H1, H2)), const((1, H2)),                # fc2 (resident)
            const((H2, OUT_PAD)), const((1, OUT_PAD)),      # fc3 (resident, padded)
        ],
        out_specs=pl.BlockSpec((TB, OUT_PAD), lambda i: (i, 0)),
        compiler_params=pltpu.CompilerParams(
            dimension_semantics=("parallel",),
            vmem_limit_bytes=VMEM_LIMIT_BYTES),
        cost_estimate=pl.CostEstimate(
            flops=flops,
            transcendentals=Bp * OUT_PAD,
            bytes_accessed=bytes_accessed),
    )(x, w1b, b1f, w2b, b2f, w3b, b3f)

    # NOTE: if the consumer can take the (Bp, 128) padded buffer directly
    # (e.g. argmax over the first 10 lanes), skip this slice to avoid a
    # strided copy.  Kept here to preserve the module's (B, 10) output.
    return out[:B, :N_CLS]


def init_params(key):
    """Deterministic synthetic parameters (shapes match MnistNet.__init__)."""
    k = jax.random.split(key, 6)
    # stored as (in, out) so the kernel does x @ W + b
    w1 = jax.random.normal(k[0], (D_IN, H1), jnp.float32) * 0.02
    b1 = jax.random.normal(k[1], (1, H1), jnp.float32) * 0.02
    w2 = jax.random.normal(k[2], (H1, H2), jnp.float32) * 0.02
    b2 = jax.random.normal(k[3], (1, H2), jnp.float32) * 0.02
    w3 = jax.random.normal(k[4], (H2, N_CLS), jnp.float32) * 0.02
    b3 = jax.random.normal(k[5], (1, N_CLS), jnp.float32) * 0.02
    return (w1, b1, w2, b2, w3, b3)


def _reference(x_nchw, params):
    """Pure-JAX reference matching the kernel's bf16-matmul / f32-accumulate path."""
    w1, b1, w2, b2, w3, b3 = params
    x = x_nchw.reshape(x_nchw.shape[0], -1).astype(jnp.bfloat16)
    h1 = jnp.maximum(
        jnp.dot(x, w1.astype(jnp.bfloat16), preferred_element_type=jnp.float32) + b1, 0.0)
    h2 = jnp.maximum(
        jnp.dot(h1.astype(jnp.bfloat16), w2.astype(jnp.bfloat16),
                preferred_element_type=jnp.float32) + b2, 0.0)
    logits = jnp.dot(h2.astype(jnp.bfloat16), w3.astype(jnp.bfloat16),
                     preferred_element_type=jnp.float32) + b3
    return jax.nn.log_softmax(logits, axis=1)


if __name__ == "__main__":
    key = jax.random.PRNGKey(0)
    kx, kp = jax.random.split(key)
    # small MNIST-like batch, NCHW as in PyTorch
    x = jax.random.normal(kx, (8, 1, 28, 28), jnp.float32)
    params = init_params(kp)

    out = mnist_net_forward(x, params)
    out = jax.block_until_ready(out)

    ref = _reference(x, params)
    assert out.shape == (8, 10)
    assert out.dtype == jnp.bfloat16
    # bf16 output -> relaxed tolerance vs the f32-softmax reference
    assert jnp.allclose(out.astype(jnp.float32), ref, atol=3e-2, rtol=3e-2), \
        "mismatch vs JAX reference"
    print("KERNEL_OK")
</pallas_src>

<mosaic_0001>
module attributes {stable_mosaic.version = 11 : i64} {
  func.func @_mnist_mlp_kernel(%arg0: i32, %arg1: memref<8x784xf32, #tpu.memory_space<vmem>>, %arg2: memref<784x128xbf16, #tpu.memory_space<vmem>>, %arg3: memref<1x128xf32, #tpu.memory_space<vmem>>, %arg4: memref<128x256xbf16, #tpu.memory_space<vmem>>, %arg5: memref<1x256xf32, #tpu.memory_space<vmem>>, %arg6: memref<256x128xbf16, #tpu.memory_space<vmem>>, %arg7: memref<1x128xf32, #tpu.memory_space<vmem>>, %arg8: memref<8x128xbf16, #tpu.memory_space<vmem>>) attributes {dimension_semantics = [#tpu.dimension_semantics<parallel>], iteration_bounds = array<i64: 1>, scalar_prefetch = 0 : i64, scratch_operands = 0 : i64, tpu.core_type = #tpu.core_type<tc>, window_params = [{transform_indices = @transform_0, window_bounds = array<i64: 8, 784>}, {pipeline_mode = #tpu.pipeline_mode<synchronous>, transform_indices = @transform_1, window_bounds = array<i64: 784, 128>}, {pipeline_mode = #tpu.pipeline_mode<synchronous>, transform_indices = @transform_2, window_bounds = array<i64: 1, 128>}, {pipeline_mode = #tpu.pipeline_mode<synchronous>, transform_indices = @transform_3, window_bounds = array<i64: 128, 256>}, {pipeline_mode = #tpu.pipeline_mode<synchronous>, transform_indices = @transform_4, window_bounds = array<i64: 1, 256>}, {pipeline_mode = #tpu.pipeline_mode<synchronous>, transform_indices = @transform_5, window_bounds = array<i64: 256, 128>}, {pipeline_mode = #tpu.pipeline_mode<synchronous>, transform_indices = @transform_6, window_bounds = array<i64: 1, 128>}, {transform_indices = @transform_7, window_bounds = array<i64: 8, 128>}]} {
    %c0 = arith.constant 0 : index
    %c0_0 = arith.constant 0 : index
    %0 = vector.load %arg1[%c0, %c0_0] : memref<8x784xf32, #tpu.memory_space<vmem>>, vector<8x784xf32>
    %1 = arith.truncf %0 : vector<8x784xf32> to vector<8x784xbf16>
    %c0_1 = arith.constant 0 : index
    %c0_2 = arith.constant 0 : index
    %2 = vector.load %arg2[%c0_1, %c0_2] : memref<784x128xbf16, #tpu.memory_space<vmem>>, vector<784x128xbf16>
    %cst = arith.constant dense<0.000000e+00> : vector<8x128xf32>
    %3 = tpu.matmul %1, %2, %cst {dimension_numbers = #tpu.dot_dimension_numbers<[1], [0], [0], [1], [0, 0, 1, 1], [], []>} : vector<8x784xbf16>, vector<784x128xbf16>, vector<8x128xf32> -> vector<8x128xf32>
    %c0_3 = arith.constant 0 : index
    %c0_4 = arith.constant 0 : index
    %4 = vector.load %arg3[%c0_3, %c0_4] : memref<1x128xf32, #tpu.memory_space<vmem>>, vector<1x128xf32>
    %5 = vector.broadcast %4 : vector<1x128xf32> to vector<8x128xf32>
    %6 = arith.addf %3, %5 : vector<8x128xf32>
    %cst_5 = arith.constant 0.000000e+00 : f32
    %7 = vector.broadcast %cst_5 : f32 to vector<8x128xf32>
    %8 = arith.maximumf %6, %7 : vector<8x128xf32>
    %9 = arith.truncf %8 : vector<8x128xf32> to vector<8x128xbf16>
    %c0_6 = arith.constant 0 : index
    %c0_7 = arith.constant 0 : index
    %10 = vector.load %arg4[%c0_6, %c0_7] : memref<128x256xbf16, #tpu.memory_space<vmem>>, vector<128x256xbf16>
    %cst_8 = arith.constant dense<0.000000e+00> : vector<8x256xf32>
    %11 = tpu.matmul %9, %10, %cst_8 {dimension_numbers = #tpu.dot_dimension_numbers<[1], [0], [0], [1], [0, 0, 1, 1], [], []>} : vector<8x128xbf16>, vector<128x256xbf16>, vector<8x256xf32> -> vector<8x256xf32>
    %c0_9 = arith.constant 0 : index
    %c0_10 = arith.constant 0 : index
    %12 = vector.load %arg5[%c0_9, %c0_10] : memref<1x256xf32, #tpu.memory_space<vmem>>, vector<1x256xf32>
    %13 = vector.broadcast %12 : vector<1x256xf32> to vector<8x256xf32>
    %14 = arith.addf %11, %13 : vector<8x256xf32>
    %cst_11 = arith.constant 0.000000e+00 : f32
    %15 = vector.broadcast %cst_11 : f32 to vector<8x256xf32>
    %16 = arith.maximumf %14, %15 : vector<8x256xf32>
    %17 = arith.truncf %16 : vector<8x256xf32> to vector<8x256xbf16>
    %c0_12 = arith.constant 0 : index
    %c0_13 = arith.constant 0 : index
    %18 = vector.load %arg6[%c0_12, %c0_13] : memref<256x128xbf16, #tpu.memory_space<vmem>>, vector<256x128xbf16>
    %cst_14 = arith.constant dense<0.000000e+00> : vector<8x128xf32>
    %19 = tpu.matmul %17, %18, %cst_14 {dimension_numbers = #tpu.dot_dimension_numbers<[1], [0], [0], [1], [0, 0, 1, 1], [], []>} : vector<8x256xbf16>, vector<256x128xbf16>, vector<8x128xf32> -> vector<8x128xf32>
    %c0_15 = arith.constant 0 : index
    %c0_16 = arith.constant 0 : index
    %20 = vector.load %arg7[%c0_15, %c0_16] : memref<1x128xf32, #tpu.memory_space<vmem>>, vector<1x128xf32>
    %21 = vector.broadcast %20 : vector<1x128xf32> to vector<8x128xf32>
    %22 = arith.addf %19, %21 : vector<8x128xf32>
    %cst_17 = arith.constant dense<0xFF800000> : vector<8xf32>
    %23 = vector.multi_reduction <maximumf>, %22, %cst_17 [1] : vector<8x128xf32> to vector<8xf32>
    %24 = vector.shape_cast %23 : vector<8xf32> to vector<8x1xf32>
    %25 = vector.broadcast %24 : vector<8x1xf32> to vector<8x128xf32>
    %26 = arith.subf %22, %25 : vector<8x128xf32>
    %27 = math.exp %26 : vector<8x128xf32>
    %cst_18 = arith.constant dense<0.000000e+00> : vector<8xf32>
    %28 = vector.multi_reduction <add>, %27, %cst_18 [1] : vector<8x128xf32> to vector<8xf32>
    %29 = vector.shape_cast %28 : vector<8xf32> to vector<8x1xf32>
    %30 = math.log %29 : vector<8x1xf32>
    %31 = vector.broadcast %30 : vector<8x1xf32> to vector<8x128xf32>
    %32 = arith.subf %26, %31 : vector<8x128xf32>
    %33 = arith.truncf %32 : vector<8x128xf32> to vector<8x128xbf16>
    %c0_19 = arith.constant 0 : index
    %c0_20 = arith.constant 0 : index
    %34 = vector.load %arg8[%c0_19, %c0_20] : memref<8x128xbf16, #tpu.memory_space<vmem>>, vector<8x128xbf16>
    tpu.vector_store %arg8[%c0_19, %c0_20], %33 {strides = array<i32>} : memref<8x128xbf16, #tpu.memory_space<vmem>>, vector<8x128xbf16>,
    return
  }
  func.func @transform_0(%arg0: i32) -> (i32, i32) {
    %c0_i32 = arith.constant 0 : i32
    %c0_i32_0 = arith.constant 0 : i32
    return %arg0, %c0_i32 : i32, i32
  }
  func.func @transform_1(%arg0: i32) -> (i32, i32) {
    %c0_i32 = arith.constant 0 : i32
    %c0_i32_0 = arith.constant 0 : i32
    %c0_i32_1 = arith.constant 0 : i32
    return %c0_i32, %c0_i32_0 : i32, i32
  }
  func.func @transform_2(%arg0: i32) -> (i32, i32) {
    %c0_i32 = arith.constant 0 : i32
    %c0_i32_0 = arith.constant 0 : i32
    %c0_i32_1 = arith.constant 0 : i32
    return %c0_i32, %c0_i32_0 : i32, i32
  }
  func.func @transform_3(%arg0: i32) -> (i32, i32) {
    %c0_i32 = arith.constant 0 : i32
    %c0_i32_0 = arith.constant 0 : i32
    %c0_i32_1 = arith.constant 0 : i32
    return %c0_i32, %c0_i32_0 : i32, i32
  }
  func.func @transform_4(%arg0: i32) -> (i32, i32) {
    %c0_i32 = arith.constant 0 : i32
    %c0_i32_0 = arith.constant 0 : i32
    %c0_i32_1 = arith.constant 0 : i32
    return %c0_i32, %c0_i32_0 : i32, i32
  }
  func.func @transform_5(%arg0: i32) -> (i32, i32) {
    %c0_i32 = arith.constant 0 : i32
    %c0_i32_0 = arith.constant 0 : i32
    %c0_i32_1 = arith.constant 0 : i32
    return %c0_i32, %c0_i32_0 : i32, i32
  }
  func.func @transform_6(%arg0: i32) -> (i32, i32) {
    %c0_i32 = arith.constant 0 : i32
    %c0_i32_0 = arith.constant 0 : i32
    %c0_i32_1 = arith.constant 0 : i32
    return %c0_i32, %c0_i32_0 : i32, i32
  }
  func.func @transform_7(%arg0: i32) -> (i32, i32) {
    %c0_i32 = arith.constant 0 : i32
    %c0_i32_0 = arith.constant 0 : i32
    return %arg0, %c0_i32 : i32, i32
  }
}

</mosaic_0001>

<llo_original>
// kernel: tpu_custom_call.1
$region0: #{tpu_custom_call.1}
  #allocation0 [shape = 'u32[]', space=smem, size = 0x4, offset = 0x4, fixed_abs, tag = 'smem constant byte address 0x4 - core index']
  #allocation1 [shape = 'u32[144,128]{1,0:T(1,128)}', space=vmem, size = 0x12000, scoped, tag = 'internal scratch']
  %s0 = inlined_call_operand.hbm [shape: f32[8,784], index: 0, kind: input, shape index: {}]
  %s1 = inlined_call_operand.hbm [shape: bf16[784,128], index: 1, kind: input, shape index: {}]
  %s2 = inlined_call_operand.vmem [shape: f32[1,128], index: 2, kind: input, shape index: {}]
  %s3 = inlined_call_operand.hbm [shape: bf16[128,256], index: 3, kind: input, shape index: {}]
  %s4 = inlined_call_operand.vmem [shape: f32[1,256], index: 4, kind: input, shape index: {}]
  %s5 = inlined_call_operand.hbm [shape: bf16[256,128], index: 5, kind: input, shape index: {}]
  %s6 = inlined_call_operand.vmem [shape: f32[1,128], index: 6, kind: input, shape index: {}]
  %s7 = inlined_call_operand.hbm [shape: bf16[8,128], index: 7, kind: output, shape index: {}]
  %s8 = sld [smem:[#allocation0]]
  $region54: #{tpu_custom_call.1} parent=0
    _
  %s10 = ssub.s32 1, %s8
  %s11 = scalar_select 0, %s10, %s8
  $region1: #{tpu_custom_call.1} parent=0
    #allocation2 [shape = 'u8[28672]{0}', space=vmem, size = 0x7000, scoped, tag = 'input window, operand 0, single buffered']
    #allocation3 [shape = 's32[1]{0}', space=sflag, size = 0x4, scoped, tag = 'scoped memory for tpu_custom_call.1']
    #allocation4 [shape = 's32[1]{0}', space=sflag, size = 0x4, scoped, tag = 'scoped memory for tpu_custom_call.1']
    #allocation5 [shape = 'u8[200704]{0}', space=vmem, size = 0x31000, scoped, tag = 'input window, operand 1, single buffered']
    #allocation6 [shape = 's32[1]{0}', space=sflag, size = 0x4, scoped, tag = 'scoped memory for tpu_custom_call.1']
    #allocation7 [shape = 'u8[65536]{0}', space=vmem, size = 0x10000, scoped, tag = 'input window, operand 3, single buffered']
    #allocation8 [shape = 'u8[65536]{0}', space=vmem, size = 0x10000, scoped, tag = 'input window, operand 5, single buffered']
    #allocation9 [shape = 's32[1]{0}', space=sflag, size = 0x4, scoped, tag = 'scoped memory for tpu_custom_call.1']
    #allocation10 [shape = 'u8[2048]{0}', space=vmem, size = 0x800, scoped, tag = 'output window, operand 0, single buffered']
    %12 = vsyncpa [#allocation3], 0
    %13 = vsyncpa [#allocation6], 0
    %14 = vsyncpa [#allocation9], 0
    %15 = vsyncpa [#allocation4], 0
    // Predicated region
    $region2: #{tpu_custom_call.1} parent=1 // pred_check
      _
    $region3: #{tpu_custom_call.1} parent=1 // pred_check_branch
      %17 = sbr.rel (0) target = $region5
    $region4: #{tpu_custom_call.1} parent=1 // pred_region
      %s19 = ssub.s32 896, 896
      %20 = vsyncadd [#allocation3], %s19
      %s22 = sshll.u32 [#allocation2], 4
      %s23 = int_to_ptr.vmem [resolvable:$true] %s22
      %25 = dma.hbm_to_vmem [thread:$0]  %s0, 896, %s23, [#allocation3]
    $region5: #{tpu_custom_call.1} parent=1 // pred_fallthru
      _
    // Predicated region
    $region6: #{tpu_custom_call.1} parent=1 // pred_check
      _
    $region7: #{tpu_custom_call.1} parent=1 // pred_check_branch
      %27 = sbr.rel (0) target = $region9
    $region8: #{tpu_custom_call.1} parent=1 // pred_region
      %s29 = ssub.s32 6272, 6272
      %30 = vsyncadd [#allocation6], %s29
      %s31 = sshll.u32 [#allocation5], 4
      %s32 = int_to_ptr.vmem [resolvable:$true] %s31
      %37 = dma.hbm_to_vmem [thread:$0]  %s1, 6272, %s32, [#allocation6], 64, 64, 4
    $region9: #{tpu_custom_call.1} parent=1 // pred_fallthru
      _
    // Predicated region
    $region10: #{tpu_custom_call.1} parent=1 // pred_check
      _
    $region11: #{tpu_custom_call.1} parent=1 // pred_check_branch
      %39 = sbr.rel (0) target = $region13
    $region12: #{tpu_custom_call.1} parent=1 // pred_region
      _
    $region13: #{tpu_custom_call.1} parent=1 // pred_fallthru
      _
    // Predicated region
    $region14: #{tpu_custom_call.1} parent=1 // pred_check
      _
    $region15: #{tpu_custom_call.1} parent=1 // pred_check_branch
      %41 = sbr.rel (0) target = $region17
    $region16: #{tpu_custom_call.1} parent=1 // pred_region
      %s43 = ssub.s32 2048, 2048
      %44 = vsyncadd [#allocation6], %s43
      %s45 = sshll.u32 [#allocation7], 4
      %s46 = int_to_ptr.vmem [resolvable:$true] %s45
      %51 = dma.hbm_to_vmem [thread:$0]  %s3, 2048, %s46, [#allocation6], 128, 128, 8
    $region17: #{tpu_custom_call.1} parent=1 // pred_fallthru
      _
    // Predicated region
    $region18: #{tpu_custom_call.1} parent=1 // pred_check
      _
    $region19: #{tpu_custom_call.1} parent=1 // pred_check_branch
      %53 = sbr.rel (0) target = $region21
    $region20: #{tpu_custom_call.1} parent=1 // pred_region
      _
    $region21: #{tpu_custom_call.1} parent=1 // pred_fallthru
      _
    // Predicated region
    $region22: #{tpu_custom_call.1} parent=1 // pred_check
      _
    $region23: #{tpu_custom_call.1} parent=1 // pred_check_branch
      %55 = sbr.rel (0) target = $region25
    $region24: #{tpu_custom_call.1} parent=1 // pred_region
      %s57 = ssub.s32 2048, 2048
      %58 = vsyncadd [#allocation9], %s57
      %s59 = sshll.u32 [#allocation8], 4
      %s60 = int_to_ptr.vmem [resolvable:$true] %s59
      %65 = dma.hbm_to_vmem [thread:$0]  %s5, 2048, %s60, [#allocation9], 64, 64, 4
    $region25: #{tpu_custom_call.1} parent=1 // pred_fallthru
      _
    // Predicated region
    $region26: #{tpu_custom_call.1} parent=1 // pred_check
      _
    $region27: #{tpu_custom_call.1} parent=1 // pred_check_branch
      %67 = sbr.rel (0) target = $region29
    $region28: #{tpu_custom_call.1} parent=1 // pred_region
      _
    $region29: #{tpu_custom_call.1} parent=1 // pred_fallthru
      _
    // Predicated region
    $region30: #{tpu_custom_call.1} parent=1 // pred_check
      _
    $region31: #{tpu_custom_call.1} parent=1 // pred_check_branch
      %69 = sbr.rel (0) target = $region33
    $region32: #{tpu_custom_call.1} parent=1 // pred_region
      %70 = dma.done [#allocation3], 896
    $region33: #{tpu_custom_call.1} parent=1 // pred_fallthru
      _
    // Predicated region
    $region34: #{tpu_custom_call.1} parent=1 // pred_check
      _
    $region35: #{tpu_custom_call.1} parent=1 // pred_check_branch
      %72 = sbr.rel (0) target = $region37
    $region36: #{tpu_custom_call.1} parent=1 // pred_region
      %73 = dma.done [#allocation6], 6272
    $region37: #{tpu_custom_call.1} parent=1 // pred_fallthru
      _
    // Predicated region
    $region38: #{tpu_custom_call.1} parent=1 // pred_check
      _
    $region39: #{tpu_custom_call.1} parent=1 // pred_check_branch
      %75 = sbr.rel (0) target = $region41
    $region40: #{tpu_custom_call.1} parent=1 // pred_region
      %76 = dma.done [#allocation6], 2048
    $region41: #{tpu_custom_call.1} parent=1 // pred_fallthru
      _
    // Predicated region
    $region42: #{tpu_custom_call.1} parent=1 // pred_check
      _
    $region43: #{tpu_custom_call.1} parent=1 // pred_check_branch
      %78 = sbr.rel (0) target = $region45
    $region44: #{tpu_custom_call.1} parent=1 // pred_region
      %79 = dma.done [#allocation9], 2048
    $region45: #{tpu_custom_call.1} parent=1 // pred_fallthru
      _
    %v81 = vld [vmem:[#allocation2] sm:$0xff]
    %v82 = vld [vmem:[#allocation2 + $0x8] sm:$0xff]
    %v83 = vld [vmem:[#allocation2 + $0x10] sm:$0xff]
    %v84 = vld [vmem:[#allocation2 + $0x18] sm:$0xff]
    %v85 = vld [vmem:[#allocation2 + $0x20] sm:$0xff]
    %v86 = vld [vmem:[#allocation2 + $0x28] sm:$0xff]
    %v87 = vld [vmem:[#allocation2 + $0x30] sm:$0xff]
    %v88 = vpack.c.bf16 %v81, %v81
    %v89 = vpack.c.bf16 %v82, %v82
    %v90 = vpack.c.bf16 %v83, %v83
    %v91 = vpack.c.bf16 %v84, %v84
    %v92 = vpack.c.bf16 %v85, %v85
    %v93 = vpack.c.bf16 %v86, %v86
    %v94 = vpack.c.bf16 %v87, %v87
    %v95 = vld [vmem:[#allocation5] sm:$0xf]
    %v96 = vld [vmem:[#allocation5 + $0x4] sm:$0xf]
    %v97 = vld [vmem:[#allocation5 + $0x8] sm:$0xf]
    %v98 = vld [vmem:[#allocation5 + $0xc] sm:$0xf]
    %v99 = vld [vmem:[#allocation5 + $0x10] sm:$0xf]
    %v100 = vld [vmem:[#allocation5 + $0x14] sm:$0xf]
    %v101 = vld [vmem:[#allocation5 + $0x18] sm:$0xf]
    %v102 = vld [vmem:[#allocation5 + $0x1c] sm:$0xf]
    %v103 = vld [vmem:[#allocation5 + $0x20] sm:$0xf]
    %v104 = vld [vmem:[#allocation5 + $0x24] sm:$0xf]
    %v105 = vld [vmem:[#allocation5 + $0x28] sm:$0xf]
    %v106 = vld [vmem:[#allocation5 + $0x2c] sm:$0xf]
    %v107 = vld [vmem:[#allocation5 + $0x30] sm:$0xf]
    %v108 = vld [vmem:[#allocation5 + $0x34] sm:$0xf]
    %v109 = vld [vmem:[#allocation5 + $0x38] sm:$0xf]
    %v110 = vld [vmem:[#allocation5 + $0x3c] sm:$0xf]
    %v111 = vld [vmem:[#allocation5 + $0x40] sm:$0xf]
    %v112 = vld [vmem:[#allocation5 + $0x44] sm:$0xf]
    %v113 = vld [vmem:[#allocation5 + $0x48] sm:$0xf]
    %v114 = vld [vmem:[#allocation5 + $0x4c] sm:$0xf]
    %v115 = vld [vmem:[#allocation5 + $0x50] sm:$0xf]
    %v116 = vld [vmem:[#allocation5 + $0x54] sm:$0xf]
    %v117 = vld [vmem:[#allocation5 + $0x58] sm:$0xf]
    %v118 = vld [vmem:[#allocation5 + $0x5c] sm:$0xf]
    %v119 = vld [vmem:[#allocation5 + $0x60] sm:$0xf]
    %v120 = vld [vmem:[#allocation5 + $0x64] sm:$0xf]
    %v121 = vld [vmem:[#allocation5 + $0x68] sm:$0xf]
    %v122 = vld [vmem:[#allocation5 + $0x6c] sm:$0xf]
    %v123 = vld [vmem:[#allocation5 + $0x70] sm:$0xf]
    %v124 = vld [vmem:[#allocation5 + $0x74] sm:$0xf]
    %v125 = vld [vmem:[#allocation5 + $0x78] sm:$0xf]
    %v126 = vld [vmem:[#allocation5 + $0x7c] sm:$0xf]
    %v127 = vld [vmem:[#allocation5 + $0x80] sm:$0xf]
    %v128 = vld [vmem:[#allocation5 + $0x84] sm:$0xf]
    %v129 = vld [vmem:[#allocation5 + $0x88] sm:$0xf]
    %v130 = vld [vmem:[#allocation5 + $0x8c] sm:$0xf]
    %v131 = vld [vmem:[#allocation5 + $0x90] sm:$0xf]
    %v132 = vld [vmem:[#allocation5 + $0x94] sm:$0xf]
    %v133 = vld [vmem:[#allocation5 + $0x98] sm:$0xf]
    %v134 = vld [vmem:[#allocation5 + $0x9c] sm:$0xf]
    %v135 = vld [vmem:[#allocation5 + $0xa0] sm:$0xf]
    %v136 = vld [vmem:[#allocation5 + $0xa4] sm:$0xf]
    %v137 = vld [vmem:[#allocation5 + $0xa8] sm:$0xf]
    %v138 = vld [vmem:[#allocation5 + $0xac] sm:$0xf]
    %v139 = vld [vmem:[#allocation5 + $0xb0] sm:$0xf]
    %v140 = vld [vmem:[#allocation5 + $0xb4] sm:$0xf]
    %v141 = vld [vmem:[#allocation5 + $0xb8] sm:$0xf]
    %v142 = vld [vmem:[#allocation5 + $0xbc] sm:$0xf]
    %v143 = vld [vmem:[#allocation5 + $0xc0] sm:$0xf]
    %v144 = vld [vmem:[#allocation5 + $0xc4] sm:$0xf]
    %v145 = vld [vmem:[#allocation5 + $0xc8] sm:$0xf]
    %v146 = vld [vmem:[#allocation5 + $0xcc] sm:$0xf]
    %v147 = vld [vmem:[#allocation5 + $0xd0] sm:$0xf]
    %v148 = vld [vmem:[#allocation5 + $0xd4] sm:$0xf]
    %v149 = vld [vmem:[#allocation5 + $0xd8] sm:$0xf]
    %v150 = vld [vmem:[#allocation5 + $0xdc] sm:$0xf]
    %v151 = vld [vmem:[#allocation5 + $0xe0] sm:$0xf]
    %v152 = vld [vmem:[#allocation5 + $0xe4] sm:$0xf]
    %v153 = vld [vmem:[#allocation5 + $0xe8] sm:$0xf]
    %v154 = vld [vmem:[#allocation5 + $0xec] sm:$0xf]
    %v155 = vld [vmem:[#allocation5 + $0xf0] sm:$0xf]
    %v156 = vld [vmem:[#allocation5 + $0xf4] sm:$0xf]
    %v157 = vld [vmem:[#allocation5 + $0xf8] sm:$0xf]
    %v158 = vld [vmem:[#allocation5 + $0xfc] sm:$0xf]
    %v159 = vld [vmem:[#allocation5 + $0x100] sm:$0xf]
    %v160 = vld [vmem:[#allocation5 + $0x104] sm:$0xf]
    %v161 = vld [vmem:[#allocation5 + $0x108] sm:$0xf]
    %v162 = vld [vmem:[#allocation5 + $0x10c] sm:$0xf]
    %v163 = vld [vmem:[#allocation5 + $0x110] sm:$0xf]
    %v164 = vld [vmem:[#allocation5 + $0x114] sm:$0xf]
    %v165 = vld [vmem:[#allocation5 + $0x118] sm:$0xf]
    %v166 = vld [vmem:[#allocation5 + $0x11c] sm:$0xf]
    %v167 = vld [vmem:[#allocation5 + $0x120] sm:$0xf]
    %v168 = vld [vmem:[#allocation5 + $0x124] sm:$0xf]
    %v169 = vld [vmem:[#allocation5 + $0x128] sm:$0xf]
    %v170 = vld [vmem:[#allocation5 + $0x12c] sm:$0xf]
    %v171 = vld [vmem:[#allocation5 + $0x130] sm:$0xf]
    %v172 = vld [vmem:[#allocation5 + $0x134] sm:$0xf]
    %v173 = vld [vmem:[#allocation5 + $0x138] sm:$0xf]
    %v174 = vld [vmem:[#allocation5 + $0x13c] sm:$0xf]
    %v175 = vld [vmem:[#allocation5 + $0x140] sm:$0xf]
    %v176 = vld [vmem:[#allocation5 + $0x144] sm:$0xf]
    %v177 = vld [vmem:[#allocation5 + $0x148] sm:$0xf]
    %v178 = vld [vmem:[#allocation5 + $0x14c] sm:$0xf]
    %v179 = vld [vmem:[#allocation5 + $0x150] sm:$0xf]
    %v180 = vld [vmem:[#allocation5 + $0x154] sm:$0xf]
    %v181 = vld [vmem:[#allocation5 + $0x158] sm:$0xf]
    %v182 = vld [vmem:[#allocation5 + $0x15c] sm:$0xf]
    %v183 = vld [vmem:[#allocation5 + $0x160] sm:$0xf]
    %v184 = vld [vmem:[#allocation5 + $0x164] sm:$0xf]
    %v185 = vld [vmem:[#allocation5 + $0x168] sm:$0xf]
    %v186 = vld [vmem:[#allocation5 + $0x16c] sm:$0xf]
    %v187 = vld [vmem:[#allocation5 + $0x170] sm:$0xf]
    %v188 = vld [vmem:[#allocation5 + $0x174] sm:$0xf]
    %v189 = vld [vmem:[#allocation5 + $0x178] sm:$0xf]
    %v190 = vld [vmem:[#allocation5 + $0x17c] sm:$0xf]
    %v191 = vld [vmem:[#allocation5 + $0x180] sm:$0xf]
    %v192 = vld [vmem:[#allocation5 + $0x184] sm:$0xf]
    %v193 = vld [vmem:[%s2] sm:$0x1]
    %v195 = vlaneseq
    %v196 = vshrl.u32 %v195, 7
    %v197 = vsub.s32 0, %v196
    %v198 = vrot.slane %v193, %v197
    %v298 = vunpack.c.l.b16 %v95
    %v299 = vunpack.c.l.b16 %v96
    %v300 = vunpack.c.l.b16 %v97
    %v301 = vunpack.c.l.b16 %v98
    %v302 = vunpack.c.l.b16 %v99
    %v303 = vunpack.c.l.b16 %v100
    %v304 = vunpack.c.l.b16 %v101
    %v305 = vunpack.c.l.b16 %v102
    %v306 = vunpack.c.l.b16 %v103
    %v307 = vunpack.c.l.b16 %v104
    %v308 = vunpack.c.l.b16 %v105
    %v309 = vunpack.c.l.b16 %v106
    %v310 = vunpack.c.l.b16 %v107
    %v311 = vunpack.c.l.b16 %v108
    %v312 = vunpack.c.l.b16 %v109
    %v313 = vunpack.c.l.b16 %v110
    %v314 = vunpack.c.l.b16 %v111
    %v315 = vunpack.c.l.b16 %v112
    %v316 = vunpack.c.l.b16 %v113
    %v317 = vunpack.c.l.b16 %v114
    %v318 = vunpack.c.l.b16 %v115
    %v319 = vunpack.c.l.b16 %v116
    %v320 = vunpack.c.l.b16 %v117
    %v321 = vunpack.c.l.b16 %v118
    %v322 = vunpack.c.l.b16 %v119
    %v323 = vunpack.c.l.b16 %v120
    %v324 = vunpack.c.l.b16 %v121
    %v325 = vunpack.c.l.b16 %v122
    %v326 = vunpack.c.l.b16 %v123
    %v327 = vunpack.c.l.b16 %v124
    %v328 = vunpack.c.l.b16 %v125
    %v329 = vunpack.c.l.b16 %v126
    %v330 = vunpack.c.l.b16 %v127
    %v331 = vunpack.c.l.b16 %v128
    %v332 = vunpack.c.l.b16 %v129
    %v333 = vunpack.c.l.b16 %v130
    %v334 = vunpack.c.l.b16 %v131
    %v335 = vunpack.c.l.b16 %v132
    %v336 = vunpack.c.l.b16 %v133
    %v337 = vunpack.c.l.b16 %v134
    %v338 = vunpack.c.l.b16 %v135
    %v339 = vunpack.c.l.b16 %v136
    %v340 = vunpack.c.l.b16 %v137
    %v341 = vunpack.c.l.b16 %v138
    %v342 = vunpack.c.l.b16 %v139
    %v343 = vunpack.c.l.b16 %v140
    %v344 = vunpack.c.l.b16 %v141
    %v345 = vunpack.c.l.b16 %v142
    %v346 = vunpack.c.l.b16 %v143
    %v347 = vunpack.c.l.b16 %v144
    %v348 = vunpack.c.l.b16 %v145
    %v349 = vunpack.c.l.b16 %v146
    %v350 = vunpack.c.l.b16 %v147
    %v351 = vunpack.c.l.b16 %v148
    %v352 = vunpack.c.l.b16 %v149
    %v353 = vunpack.c.l.b16 %v150
    %v354 = vunpack.c.l.b16 %v151
    %v355 = vunpack.c.l.b16 %v152
    %v356 = vunpack.c.l.b16 %v153
    %v357 = vunpack.c.l.b16 %v154
    %v358 = vunpack.c.l.b16 %v155
    %v359 = vunpack.c.l.b16 %v156
    %v360 = vunpack.c.l.b16 %v157
    %v361 = vunpack.c.l.b16 %v158
    %v362 = vunpack.c.l.b16 %v159
    %v363 = vunpack.c.l.b16 %v160
    %v364 = vunpack.c.l.b16 %v161
    %v365 = vunpack.c.l.b16 %v162
    %v366 = vunpack.c.l.b16 %v163
    %v367 = vunpack.c.l.b16 %v164
    %v368 = vunpack.c.l.b16 %v165
    %v369 = vunpack.c.l.b16 %v166
    %v370 = vunpack.c.l.b16 %v167
    %v371 = vunpack.c.l.b16 %v168
    %v372 = vunpack.c.l.b16 %v169
    %v373 = vunpack.c.l.b16 %v170
    %v374 = vunpack.c.l.b16 %v171
    %v375 = vunpack.c.l.b16 %v172
    %v376 = vunpack.c.l.b16 %v173
    %v377 = vunpack.c.l.b16 %v174
    %v378 = vunpack.c.l.b16 %v175
    %v379 = vunpack.c.l.b16 %v176
    %v380 = vunpack.c.l.b16 %v177
    %v381 = vunpack.c.l.b16 %v178
    %v382 = vunpack.c.l.b16 %v179
    %v383 = vunpack.c.l.b16 %v180
    %v384 = vunpack.c.l.b16 %v181
    %v385 = vunpack.c.l.b16 %v182
    %v386 = vunpack.c.l.b16 %v183
    %v387 = vunpack.c.l.b16 %v184
    %v388 = vunpack.c.l.b16 %v185
    %v389 = vunpack.c.l.b16 %v186
    %v390 = vunpack.c.l.b16 %v187
    %v391 = vunpack.c.l.b16 %v188
    %v392 = vunpack.c.l.b16 %v189
    %v393 = vunpack.c.l.b16 %v190
    %v394 = vunpack.c.l.b16 %v191
    %v395 = vunpack.c.l.b16 %v192
    %v396 = vpack.c.b16 %v299, %v298
    %v397 = vpack.c.b16 %v301, %v300
    %v398 = vpack.c.b16 %v303, %v302
    %v399 = vpack.c.b16 %v305, %v304
    %v400 = vpack.c.b16 %v307, %v306
    %v401 = vpack.c.b16 %v309, %v308
    %v402 = vpack.c.b16 %v311, %v310
    %v403 = vpack.c.b16 %v313, %v312
    %v404 = vpack.c.b16 %v315, %v314
    %v405 = vpack.c.b16 %v317, %v316
    %v406 = vpack.c.b16 %v319, %v318
    %v407 = vpack.c.b16 %v321, %v320
    %v408 = vpack.c.b16 %v323, %v322
    %v409 = vpack.c.b16 %v325, %v324
    %v410 = vpack.c.b16 %v327, %v326
    %v411 = vpack.c.b16 %v329, %v328
    %v412 = vpack.c.b16 %v331, %v330
    %v413 = vpack.c.b16 %v333, %v332
    %v414 = vpack.c.b16 %v335, %v334
    %v415 = vpack.c.b16 %v337, %v336
    %v416 = vpack.c.b16 %v339, %v338
    %v417 = vpack.c.b16 %v341, %v340
    %v418 = vpack.c.b16 %v343, %v342
    %v419 = vpack.c.b16 %v345, %v344
    %v420 = vpack.c.b16 %v347, %v346
    %v421 = vpack.c.b16 %v349, %v348
    %v422 = vpack.c.b16 %v351, %v350
    %v423 = vpack.c.b16 %v353, %v352
    %v424 = vpack.c.b16 %v355, %v354
    %v425 = vpack.c.b16 %v357, %v356
    %v426 = vpack.c.b16 %v359, %v358
    %v427 = vpack.c.b16 %v361, %v360
    %v428 = vpack.c.b16 %v363, %v362
    %v429 = vpack.c.b16 %v365, %v364
    %v430 = vpack.c.b16 %v367, %v366
    %v431 = vpack.c.b16 %v369, %v368
    %v432 = vpack.c.b16 %v371, %v370
    %v433 = vpack.c.b16 %v373, %v372
    %v434 = vpack.c.b16 %v375, %v374
    %v435 = vpack.c.b16 %v377, %v376
    %v436 = vpack.c.b16 %v379, %v378
    %v437 = vpack.c.b16 %v381, %v380
    %v438 = vpack.c.b16 %v383, %v382
    %v439 = vpack.c.b16 %v385, %v384
    %v440 = vpack.c.b16 %v387, %v386
    %v441 = vpack.c.b16 %v389, %v388
    %v442 = vpack.c.b16 %v391, %v390
    %v443 = vpack.c.b16 %v393, %v392
    %v444 = vpack.c.b16 %v395, %v394
    %vm494 = vcmask 130048
    %v496 = vsel %vm494, %v94, 0
    %498 = vmatprep.subr.bf16.mxu0 0
    %499 = vmatpush1.bf16.msra.mxu0 %v403
    %500 = vmatprep.subr.bf16.mxu0 0
    %501 = vmatpush1.bf16.msra.mxu0 %v402
    %502 = vmatprep.subr.bf16.mxu0 0
    %503 = vmatpush1.bf16.msra.mxu0 %v401
    %504 = vmatprep.subr.bf16.mxu0 0
    %505 = vmatpush1.bf16.msra.mxu0 %v400
    %506 = vmatprep.subr.bf16.mxu0 0
    %507 = vmatpush1.bf16.msra.mxu0 %v399
    %508 = vmatprep.subr.bf16.mxu0 0
    %509 = vmatpush1.bf16.msra.mxu0 %v398
    %510 = vmatprep.subr.bf16.mxu0 0
    %511 = vmatpush1.bf16.msra.mxu0 %v397
    %512 = vmatprep.subr.bf16.mxu0 0
    %513 = vmatpush1.bf16.msra.mxu0 %v396
    %514 = vmatprep.subr.bf16.mxu0 0
    %515 = vmatpush2.bf16.msra.mxu0 %v411
    %516 = vmatprep.subr.bf16.mxu0 0
    %517 = vmatpush2.bf16.msra.mxu0 %v410
    %518 = vmatprep.subr.bf16.mxu0 0
    %519 = vmatpush2.bf16.msra.mxu0 %v409
    %520 = vmatprep.subr.bf16.mxu0 0
    %521 = vmatpush2.bf16.msra.mxu0 %v408
    %522 = vmatprep.subr.bf16.mxu0 0
    %523 = vmatpush2.bf16.msra.mxu0 %v407
    %524 = vmatprep.subr.bf16.mxu0 0
    %525 = vmatpush2.bf16.msra.mxu0 %v406
    %526 = vmatprep.subr.bf16.mxu0 0
    %527 = vmatpush2.bf16.msra.mxu0 %v405
    %528 = vmatprep.subr.bf16.mxu0 0
    %529 = vmatpush2.bf16.msra.mxu0 %v404
    %530 = vmatprep.mubr.bf16.mxu0 %v89
    %531 = vmatmul.mubr.bf16.gmra.mxu0 %v88
    %v532 = vpop.f32.mrf.mxu0
    %v533 = vadd.f32 %v198, %v532
    %v534 = vpop.f32.mrf.mxu0
    %v535 = vpop.f32.mrf.mxu0
    %v536 = vpop.f32.mrf.mxu0
    %537 = vdwg.mxu0
    %538 = vmatprep.subr.bf16.mxu0 0
    %539 = vmatpush1.bf16.msra.mxu0 %v419
    %540 = vmatprep.subr.bf16.mxu0 0
    %541 = vmatpush1.bf16.msra.mxu0 %v418
    %542 = vmatprep.subr.bf16.mxu0 0
    %543 = vmatpush1.bf16.msra.mxu0 %v417
    %544 = vmatprep.subr.bf16.mxu0 0
    %545 = vmatpush1.bf16.msra.mxu0 %v416
    %546 = vmatprep.subr.bf16.mxu0 0
    %547 = vmatpush1.bf16.msra.mxu0 %v415
    %548 = vmatprep.subr.bf16.mxu0 0
    %549 = vmatpush1.bf16.msra.mxu0 %v414
    %550 = vmatprep.subr.bf16.mxu0 0
    %551 = vmatpush1.bf16.msra.mxu0 %v413
    %552 = vmatprep.subr.bf16.mxu0 0
    %553 = vmatpush1.bf16.msra.mxu0 %v412
    %554 = vmatprep.subr.bf16.mxu0 0
    %555 = vmatpush2.bf16.msra.mxu0 %v427
    %556 = vmatprep.subr.bf16.mxu0 0
    %557 = vmatpush2.bf16.msra.mxu0 %v426
    %558 = vmatprep.subr.bf16.mxu0 0
    %559 = vmatpush2.bf16.msra.mxu0 %v425
    %560 = vmatprep.subr.bf16.mxu0 0
    %561 = vmatpush2.bf16.msra.mxu0 %v424
    %562 = vmatprep.subr.bf16.mxu0 0
    %563 = vmatpush2.bf16.msra.mxu0 %v423
    %564 = vmatprep.subr.bf16.mxu0 0
    %565 = vmatpush2.bf16.msra.mxu0 %v422
    %566 = vmatprep.subr.bf16.mxu0 0
    %567 = vmatpush2.bf16.msra.mxu0 %v421
    %568 = vmatprep.subr.bf16.mxu0 0
    %569 = vmatpush2.bf16.msra.mxu0 %v420
    %570 = vmatprep.mubr.bf16.mxu0 %v91
    %571 = vmatmul.mubr.bf16.gmra.mxu0 %v90
    %v572 = vpop.f32.mrf.mxu0
    %v573 = vadd.f32 %v533, %v572
    %v574 = vpop.f32.mrf.mxu0
    %v575 = vpop.f32.mrf.mxu0
    %v576 = vpop.f32.mrf.mxu0
    %577 = vdwg.mxu0
    %578 = vmatprep.subr.bf16.mxu0 0
    %579 = vmatpush1.bf16.msra.mxu0 %v435
    %580 = vmatprep.subr.bf16.mxu0 0
    %581 = vmatpush1.bf16.msra.mxu0 %v434
    %582 = vmatprep.subr.bf16.mxu0 0
    %583 = vmatpush1.bf16.msra.mxu0 %v433
    %584 = vmatprep.subr.bf16.mxu0 0
    %585 = vmatpush1.bf16.msra.mxu0 %v432
    %586 = vmatprep.subr.bf16.mxu0 0
    %587 = vmatpush1.bf16.msra.mxu0 %v431
    %588 = vmatprep.subr.bf16.mxu0 0
    %589 = vmatpush1.bf16.msra.mxu0 %v430
    %590 = vmatprep.subr.bf16.mxu0 0
    %591 = vmatpush1.bf16.msra.mxu0 %v429
    %592 = vmatprep.subr.bf16.mxu0 0
    %593 = vmatpush1.bf16.msra.mxu0 %v428
    %594 = vmatprep.subr.bf16.mxu0 0
    %595 = vmatpush2.bf16.msra.mxu0 %v443
    %596 = vmatprep.subr.bf16.mxu0 0
    %597 = vmatpush2.bf16.msra.mxu0 %v442
    %598 = vmatprep.subr.bf16.mxu0 0
    %599 = vmatpush2.bf16.msra.mxu0 %v441
    %600 = vmatprep.subr.bf16.mxu0 0
    %601 = vmatpush2.bf16.msra.mxu0 %v440
    %602 = vmatprep.subr.bf16.mxu0 0
    %603 = vmatpush2.bf16.msra.mxu0 %v439
    %604 = vmatprep.subr.bf16.mxu0 0
    %605 = vmatpush2.bf16.msra.mxu0 %v438
    %606 = vmatprep.subr.bf16.mxu0 0
    %607 = vmatpush2.bf16.msra.mxu0 %v437
    %608 = vmatprep.subr.bf16.mxu0 0
    %609 = vmatpush2.bf16.msra.mxu0 %v436
    %610 = vmatprep.mubr.bf16.mxu0 %v93
    %611 = vmatmul.mubr.bf16.gmra.mxu0 %v92
    %v612 = vpop.f32.mrf.mxu0
    %v613 = vadd.f32 %v573, %v612
    %v614 = vpop.f32.mrf.mxu0
    %v615 = vpop.f32.mrf.mxu0
    %v616 = vpop.f32.mrf.mxu0
    %617 = vdwg.mxu0
    %618 = vmatprep.subr.bf16.mxu0 0
    %619 = vmatpush1.bf16.msra.mxu0 0
    %620 = vmatprep.subr.bf16.mxu0 0
    %621 = vmatpush1.bf16.msra.mxu0 0
    %622 = vmatprep.subr.bf16.mxu0 0
    %623 = vmatpush1.bf16.msra.mxu0 0
    %624 = vmatprep.subr.bf16.mxu0 0
    %625 = vmatpush1.bf16.msra.mxu0 0
    %626 = vmatprep.subr.bf16.mxu0 0
    %627 = vmatpush1.bf16.msra.mxu0 0
    %628 = vmatprep.subr.bf16.mxu0 0
    %629 = vmatpush1.bf16.msra.mxu0 0
    %630 = vmatprep.subr.bf16.mxu0 0
    %631 = vmatpush1.bf16.msra.mxu0 0
    %632 = vmatprep.subr.bf16.mxu0 0
    %633 = vmatpush1.bf16.msra.mxu0 %v444
    %634 = vmatprep.subr.bf16.mxu0 0
    %635 = vmatpush2.bf16.msra.mxu0 0
    %636 = vmatprep.subr.bf16.mxu0 0
    %637 = vmatpush2.bf16.msra.mxu0 0
    %638 = vmatprep.subr.bf16.mxu0 0
    %639 = vmatpush2.bf16.msra.mxu0 0
    %640 = vmatprep.subr.bf16.mxu0 0
    %641 = vmatpush2.bf16.msra.mxu0 0
    %642 = vmatprep.subr.bf16.mxu0 0
    %643 = vmatpush2.bf16.msra.mxu0 0
    %644 = vmatprep.subr.bf16.mxu0 0
    %645 = vmatpush2.bf16.msra.mxu0 0
    %646 = vmatprep.subr.bf16.mxu0 0
    %647 = vmatpush2.bf16.msra.mxu0 0
    %648 = vmatprep.subr.bf16.mxu0 0
    %649 = vmatpush2.bf16.msra.mxu0 0
    %650 = vmatprep.mubr.bf16.mxu0 0
    %651 = vmatmul.mubr.bf16.gmra.mxu0 %v496
    %v652 = vpop.f32.mrf.mxu0
    %v653 = vadd.f32 %v613, %v652
    %v654 = vpop.f32.mrf.mxu0
    %v655 = vpop.f32.mrf.mxu0
    %v656 = vpop.f32.mrf.mxu0
    %657 = vdwg.mxu0
    %v658 = vmax.f32 %v653, 0.0
    %v659 = vpack.c.bf16 %v658, %v658
    %v660 = vld [vmem:[#allocation7] sm:$0xff]
    %v661 = vld [vmem:[#allocation7 + $0x8] sm:$0xff]
    %v662 = vld [vmem:[#allocation7 + $0x10] sm:$0xff]
    %v663 = vld [vmem:[#allocation7 + $0x18] sm:$0xff]
    %v664 = vld [vmem:[#allocation7 + $0x20] sm:$0xff]
    %v665 = vld [vmem:[#allocation7 + $0x28] sm:$0xff]
    %v666 = vld [vmem:[#allocation7 + $0x30] sm:$0xff]
    %v667 = vld [vmem:[#allocation7 + $0x38] sm:$0xff]
    %v668 = vld [vmem:[#allocation7 + $0x40] sm:$0xff]
    %v669 = vld [vmem:[#allocation7 + $0x48] sm:$0xff]
    %v670 = vld [vmem:[#allocation7 + $0x50] sm:$0xff]
    %v671 = vld [vmem:[#allocation7 + $0x58] sm:$0xff]
    %v672 = vld [vmem:[#allocation7 + $0x60] sm:$0xff]
    %v673 = vld [vmem:[#allocation7 + $0x68] sm:$0xff]
    %v674 = vld [vmem:[#allocation7 + $0x70] sm:$0xff]
    %v675 = vld [vmem:[#allocation7 + $0x78] sm:$0xff]
    %v676 = vld [vmem:[%s4] sm:$0x3]
    %v678 = vlaneseq
    %v679 = vshrl.u32 %v678, 7
    %v680 = vsub.s32 0, %v679
    %v681 = vrot.slane %v676, %v680
    %v682 = vlaneseq
    %v683 = vshrl.u32 %v682, 7
    %v684 = vsub.s32 1, %v683
    %v685 = vrot.slane %v676, %v684
    %v704 = vunpack.c.l.b16 %v660
    %v705 = vunpack.c.h.b16 %v660
    %v706 = vunpack.c.l.b16 %v661
    %v707 = vunpack.c.h.b16 %v661
    %v708 = vunpack.c.l.b16 %v662
    %v709 = vunpack.c.h.b16 %v662
    %v710 = vunpack.c.l.b16 %v663
    %v711 = vunpack.c.h.b16 %v663
    %v712 = vunpack.c.l.b16 %v664
    %v713 = vunpack.c.h.b16 %v664
    %v714 = vunpack.c.l.b16 %v665
    %v715 = vunpack.c.h.b16 %v665
    %v716 = vunpack.c.l.b16 %v666
    %v717 = vunpack.c.h.b16 %v666
    %v718 = vunpack.c.l.b16 %v667
    %v719 = vunpack.c.h.b16 %v667
    %v720 = vunpack.c.l.b16 %v668
    %v721 = vunpack.c.h.b16 %v668
    %v722 = vunpack.c.l.b16 %v669
    %v723 = vunpack.c.h.b16 %v669
    %v724 = vunpack.c.l.b16 %v670
    %v725 = vunpack.c.h.b16 %v670
    %v726 = vunpack.c.l.b16 %v671
    %v727 = vunpack.c.h.b16 %v671
    %v728 = vunpack.c.l.b16 %v672
    %v729 = vunpack.c.h.b16 %v672
    %v730 = vunpack.c.l.b16 %v673
    %v731 = vunpack.c.h.b16 %v673
    %v732 = vunpack.c.l.b16 %v674
    %v733 = vunpack.c.h.b16 %v674
    %v734 = vunpack.c.l.b16 %v675
    %v735 = vunpack.c.h.b16 %v675
    %v736 = vpack.c.b16 %v706, %v704
    %v737 = vpack.c.b16 %v707, %v705
    %v738 = vpack.c.b16 %v710, %v708
    %v739 = vpack.c.b16 %v711, %v709
    %v740 = vpack.c.b16 %v714, %v712
    %v741 = vpack.c.b16 %v715, %v713
    %v742 = vpack.c.b16 %v718, %v716
    %v743 = vpack.c.b16 %v719, %v717
    %v744 = vpack.c.b16 %v722, %v720
    %v745 = vpack.c.b16 %v723, %v721
    %v746 = vpack.c.b16 %v726, %v724
    %v747 = vpack.c.b16 %v727, %v725
    %v748 = vpack.c.b16 %v730, %v728
    %v749 = vpack.c.b16 %v731, %v729
    %v750 = vpack.c.b16 %v734, %v732
    %v751 = vpack.c.b16 %v735, %v733
    %768 = vmatprep.subr.bf16.mxu0 %v751
    %769 = vmatpush1.bf16.msra.mxu0 %v750
    %770 = vmatprep.subr.bf16.mxu0 %v749
    %771 = vmatpush1.bf16.msra.mxu0 %v748
    %772 = vmatprep.subr.bf16.mxu0 %v747
    %773 = vmatpush1.bf16.msra.mxu0 %v746
    %774 = vmatprep.subr.bf16.mxu0 %v745
    %775 = vmatpush1.bf16.msra.mxu0 %v744
    %776 = vmatprep.subr.bf16.mxu0 %v743
    %777 = vmatpush1.bf16.msra.mxu0 %v742
    %778 = vmatprep.subr.bf16.mxu0 %v741
    %779 = vmatpush1.bf16.msra.mxu0 %v740
    %780 = vmatprep.subr.bf16.mxu0 %v739
    %781 = vmatpush1.bf16.msra.mxu0 %v738
    %782 = vmatprep.subr.bf16.mxu0 %v737
    %783 = vmatpush1.bf16.msra.mxu0 %v736
    %784 = vmatprep.subr.bf16.mxu0 0
    %785 = vmatpush2.bf16.msra.mxu0 0
    %786 = vmatprep.subr.bf16.mxu0 0
    %787 = vmatpush2.bf16.msra.mxu0 0
    %788 = vmatprep.subr.bf16.mxu0 0
    %789 = vmatpush2.bf16.msra.mxu0 0
    %790 = vmatprep.subr.bf16.mxu0 0
    %791 = vmatpush2.bf16.msra.mxu0 0
    %792 = vmatprep.subr.bf16.mxu0 0
    %793 = vmatpush2.bf16.msra.mxu0 0
    %794 = vmatprep.subr.bf16.mxu0 0
    %795 = vmatpush2.bf16.msra.mxu0 0
    %796 = vmatprep.subr.bf16.mxu0 0
    %797 = vmatpush2.bf16.msra.mxu0 0
    %798 = vmatprep.subr.bf16.mxu0 0
    %799 = vmatpush2.bf16.msra.mxu0 0
    %800 = vmatprep.mubr.bf16.mxu0 0
    %801 = vmatmul.mubr.bf16.gmra.mxu0 %v659
    %v802 = vpop.f32.mrf.mxu0
    %v803 = vadd.f32 %v681, %v802
    %v804 = vpop.f32.mrf.mxu0
    %v805 = vadd.f32 %v685, %v804
    %v806 = vpop.f32.mrf.mxu0
    %v807 = vpop.f32.mrf.mxu0
    %808 = vdwg.mxu0
    %v809 = vmax.f32 %v803, 0.0
    %v810 = vmax.f32 %v805, 0.0
    %v811 = vpack.c.bf16 %v809, %v809
    %v812 = vpack.c.bf16 %v810, %v810
    %v813 = vld [vmem:[#allocation8] sm:$0xf]
    %v814 = vld [vmem:[#allocation8 + $0x4] sm:$0xf]
    %v815 = vld [vmem:[#allocation8 + $0x8] sm:$0xf]
    %v816 = vld [vmem:[#allocation8 + $0xc] sm:$0xf]
    %v817 = vld [vmem:[#allocation8 + $0x10] sm:$0xf]
    %v818 = vld [vmem:[#allocation8 + $0x14] sm:$0xf]
    %v819 = vld [vmem:[#allocation8 + $0x18] sm:$0xf]
    %v820 = vld [vmem:[#allocation8 + $0x1c] sm:$0xf]
    %v821 = vld [vmem:[#allocation8 + $0x20] sm:$0xf]
    %v822 = vld [vmem:[#allocation8 + $0x24] sm:$0xf]
    %v823 = vld [vmem:[#allocation8 + $0x28] sm:$0xf]
    %v824 = vld [vmem:[#allocation8 + $0x2c] sm:$0xf]
    %v825 = vld [vmem:[#allocation8 + $0x30] sm:$0xf]
    %v826 = vld [vmem:[#allocation8 + $0x34] sm:$0xf]
    %v827 = vld [vmem:[#allocation8 + $0x38] sm:$0xf]
    %v828 = vld [vmem:[#allocation8 + $0x3c] sm:$0xf]
    %v829 = vld [vmem:[#allocation8 + $0x40] sm:$0xf]
    %v830 = vld [vmem:[#allocation8 + $0x44] sm:$0xf]
    %v831 = vld [vmem:[#allocation8 + $0x48] sm:$0xf]
    %v832 = vld [vmem:[#allocation8 + $0x4c] sm:$0xf]
    %v833 = vld [vmem:[#allocation8 + $0x50] sm:$0xf]
    %v834 = vld [vmem:[#allocation8 + $0x54] sm:$0xf]
    %v835 = vld [vmem:[#allocation8 + $0x58] sm:$0xf]
    %v836 = vld [vmem:[#allocation8 + $0x5c] sm:$0xf]
    %v837 = vld [vmem:[#allocation8 + $0x60] sm:$0xf]
    %v838 = vld [vmem:[#allocation8 + $0x64] sm:$0xf]
    %v839 = vld [vmem:[#allocation8 + $0x68] sm:$0xf]
    %v840 = vld [vmem:[#allocation8 + $0x6c] sm:$0xf]
    %v841 = vld [vmem:[#allocation8 + $0x70] sm:$0xf]
    %v842 = vld [vmem:[#allocation8 + $0x74] sm:$0xf]
    %v843 = vld [vmem:[#allocation8 + $0x78] sm:$0xf]
    %v844 = vld [vmem:[#allocation8 + $0x7c] sm:$0xf]
    %v845 = vld [vmem:[%s6] sm:$0x1]
    %v847 = vlaneseq
    %v848 = vshrl.u32 %v847, 7
    %v849 = vsub.s32 0, %v848
    %v850 = vrot.slane %v845, %v849
    %v884 = vunpack.c.l.b16 %v813
    %v885 = vunpack.c.l.b16 %v814
    %v886 = vunpack.c.l.b16 %v815
    %v887 = vunpack.c.l.b16 %v816
    %v888 = vunpack.c.l.b16 %v817
    %v889 = vunpack.c.l.b16 %v818
    %v890 = vunpack.c.l.b16 %v819
    %v891 = vunpack.c.l.b16 %v820
    %v892 = vunpack.c.l.b16 %v821
    %v893 = vunpack.c.l.b16 %v822
    %v894 = vunpack.c.l.b16 %v823
    %v895 = vunpack.c.l.b16 %v824
    %v896 = vunpack.c.l.b16 %v825
    %v897 = vunpack.c.l.b16 %v826
    %v898 = vunpack.c.l.b16 %v827
    %v899 = vunpack.c.l.b16 %v828
    %v900 = vunpack.c.l.b16 %v829
    %v901 = vunpack.c.l.b16 %v830
    %v902 = vunpack.c.l.b16 %v831
    %v903 = vunpack.c.l.b16 %v832
    %v904 = vunpack.c.l.b16 %v833
    %v905 = vunpack.c.l.b16 %v834
    %v906 = vunpack.c.l.b16 %v835
    %v907 = vunpack.c.l.b16 %v836
    %v908 = vunpack.c.l.b16 %v837
    %v909 = vunpack.c.l.b16 %v838
    %v910 = vunpack.c.l.b16 %v839
    %v911 = vunpack.c.l.b16 %v840
    %v912 = vunpack.c.l.b16 %v841
    %v913 = vunpack.c.l.b16 %v842
    %v914 = vunpack.c.l.b16 %v843
    %v915 = vunpack.c.l.b16 %v844
    %v916 = vpack.c.b16 %v885, %v884
    %v917 = vpack.c.b16 %v887, %v886
    %v918 = vpack.c.b16 %v889, %v888
    %v919 = vpack.c.b16 %v891, %v890
    %v920 = vpack.c.b16 %v893, %v892
    %v921 = vpack.c.b16 %v895, %v894
    %v922 = vpack.c.b16 %v897, %v896
    %v923 = vpack.c.b16 %v899, %v898
    %v924 = vpack.c.b16 %v901, %v900
    %v925 = vpack.c.b16 %v903, %v902
    %v926 = vpack.c.b16 %v905, %v904
    %v927 = vpack.c.b16 %v907, %v906
    %v928 = vpack.c.b16 %v909, %v908
    %v929 = vpack.c.b16 %v911, %v910
    %v930 = vpack.c.b16 %v913, %v912
    %v931 = vpack.c.b16 %v915, %v914
    %948 = vmatprep.subr.bf16.mxu0 0
    %949 = vmatpush1.bf16.msra.mxu0 %v923
    %950 = vmatprep.subr.bf16.mxu0 0
    %951 = vmatpush1.bf16.msra.mxu0 %v922
    %952 = vmatprep.subr.bf16.mxu0 0
    %953 = vmatpush1.bf16.msra.mxu0 %v921
    %954 = vmatprep.subr.bf16.mxu0 0
    %955 = vmatpush1.bf16.msra.mxu0 %v920
    %956 = vmatprep.subr.bf16.mxu0 0
    %957 = vmatpush1.bf16.msra.mxu0 %v919
    %958 = vmatprep.subr.bf16.mxu0 0
    %959 = vmatpush1.bf16.msra.mxu0 %v918
    %960 = vmatprep.subr.bf16.mxu0 0
    %961 = vmatpush1.bf16.msra.mxu0 %v917
    %962 = vmatprep.subr.bf16.mxu0 0
    %963 = vmatpush1.bf16.msra.mxu0 %v916
    %964 = vmatprep.subr.bf16.mxu0 0
    %965 = vmatpush2.bf16.msra.mxu0 %v931
    %966 = vmatprep.subr.bf16.mxu0 0
    %967 = vmatpush2.bf16.msra.mxu0 %v930
    %968 = vmatprep.subr.bf16.mxu0 0
    %969 = vmatpush2.bf16.msra.mxu0 %v929
    %970 = vmatprep.subr.bf16.mxu0 0
    %971 = vmatpush2.bf16.msra.mxu0 %v928
    %972 = vmatprep.subr.bf16.mxu0 0
    %973 = vmatpush2.bf16.msra.mxu0 %v927
    %974 = vmatprep.subr.bf16.mxu0 0
    %975 = vmatpush2.bf16.msra.mxu0 %v926
    %976 = vmatprep.subr.bf16.mxu0 0
    %977 = vmatpush2.bf16.msra.mxu0 %v925
    %978 = vmatprep.subr.bf16.mxu0 0
    %979 = vmatpush2.bf16.msra.mxu0 %v924
    %980 = vmatprep.mubr.bf16.mxu0 %v812
    %981 = vmatmul.mubr.bf16.gmra.mxu0 %v811
    %v982 = vpop.f32.mrf.mxu0
    %v983 = vadd.f32 %v850, %v982
    %v984 = vpop.f32.mrf.mxu0
    %v985 = vpop.f32.mrf.mxu0
    %v986 = vpop.f32.mrf.mxu0
    %987 = vdwg.mxu0
    %988 = vmax.xlane.f32.xlu0 %v983
    %v989 = vpop.xlane.xlu0 %988
    %v990 = vsub.f32 %v983, %v989
    %v991 = vmul.f32 %v990, 1.442695
    %v992 = vpow.pop %v991
    %993 = vadd.xlane.f32.xlu0 %v992
    %v994 = vpop.xlane.xlu0 %993
    %v995 = vlog2.pop %v994
    %v996 = vmul.f32 %v995, 0.6931472
    %v997 = vsub.f32 %v990, %v996
    %v998 = vpack.c.bf16 %v997, %v997
    %999 = vst [vmem:[#allocation10] sm:$0xf] %v998
    // Predicated region
    $region46: #{tpu_custom_call.1} parent=1 // pred_check
      _
    $region47: #{tpu_custom_call.1} parent=1 // pred_check_branch
      %1001 = sbr.rel (0) target = $region49
    $region48: #{tpu_custom_call.1} parent=1 // pred_region
      %s1003 = ssub.s32 64, 64
      %1004 = vsyncadd [#allocation4], %s1003
      %s1006 = sshll.u32 [#allocation10], 4
      %s1007 = int_to_ptr.vmem [resolvable:$true] %s1006
      %1009 = dma.vmem_to_hbm [thread:$0]  %s1007, 64, %s7, [#allocation4]
    $region49: #{tpu_custom_call.1} parent=1 // pred_fallthru
      _
    // Predicated region
    $region50: #{tpu_custom_call.1} parent=1 // pred_check
      _
    $region51: #{tpu_custom_call.1} parent=1 // pred_check_branch
      %1011 = sbr.rel (0) target = $region53
    $region52: #{tpu_custom_call.1} parent=1 // pred_region
      %1012 = dma.done [#allocation4], 64
    $region53: #{tpu_custom_call.1} parent=1 // pred_fallthru
      _
    %1013 = vsyncpa [#allocation3], 1
    %1014 = vsyncpa [#allocation6], 1
    %1015 = vsyncpa [#allocation9], 1
    %1016 = vsyncpa [#allocation4], 1

</llo_original>
